<compile_context>
chip_gen: v7x
topology: tpu7x:2x2x1
jax: 0.10.0
libtpu: 0.0.40
codegen_flags: <defaults>
</compile_context>

<pallas_src>
import functools

import jax
import jax.numpy as jnp
from jax import lax
from jax.experimental import pallas as pl
from jax.experimental.pallas import tpu as pltpu


LANE = 128  # TPU lane width: lane-dense outputs want last dim % 128 == 0


# ---------------------------------------------------------------------------
# Pallas kernel: one M-tile of (block_M, K) @ (K, N_pad) + bias -> (block_M, N_pad)
# ---------------------------------------------------------------------------
def _proj_kernel(x_ref, w_ref, b_ref, o_ref):
    # bf16 x bf16 -> f32 accumulation on the MXU; bias add in f32.
    acc = jnp.dot(x_ref[...], w_ref[...], preferred_element_type=jnp.float32)
    o_ref[...] = (acc + b_ref[...]).astype(o_ref.dtype)


def _proj_pallas(patches, w_km, bias2d, *, block_m=1024):
    """patches:(M,K) bf16, w_km:(K,N_pad) bf16, bias2d:(1,N_pad) f32 -> (M,N_pad) f32."""
    M, K = patches.shape
    _, Np = w_km.shape
    # Biggest tile that fits comfortably; clamp to M so small problems use a
    # single full-extent block (keeps the (8,128) block rule satisfied either way).
    bm = min(block_m, M)
    grid = (pl.cdiv(M, bm),)
    return pl.pallas_call(
        _proj_kernel,
        out_shape=jax.ShapeDtypeStruct((M, Np), jnp.float32),
        grid_spec=pltpu.PrefetchScalarGridSpec(
            num_scalar_prefetch=0,
            grid=grid,
            in_specs=[
                pl.BlockSpec((bm, K), lambda i: (i, 0)),   # activations: tiled over M
                pl.BlockSpec((K, Np), lambda i: (0, 0)),   # weight: resident
                pl.BlockSpec((1, Np), lambda i: (0, 0)),   # bias: resident
            ],
            out_specs=pl.BlockSpec((bm, Np), lambda i: (i, 0)),
        ),
        compiler_params=pltpu.CompilerParams(
            dimension_semantics=("parallel",)),  # M-tiles are independent (v7x: 2 TCs)
    )(patches, w_km, bias2d)


# ---------------------------------------------------------------------------
# PatchEmbed module (deterministic synthetic params, no checkpoint loading)
# ---------------------------------------------------------------------------
class PatchEmbedPallas:
    def __init__(self, img_size=(16, 16), patch_size=(4, 4), in_chans=4,
                 embed_dim=32, key=jax.random.PRNGKey(0), block_m=1024):
        self.img_size = img_size
        self.patch_size = patch_size
        self.in_chans = in_chans
        self.embed_dim = embed_dim
        self.block_m = block_m
        self.patches_resolution = (img_size[0] // patch_size[0],
                                   img_size[1] // patch_size[1])
        self.num_patches = self.patches_resolution[0] * self.patches_resolution[1]

        kw, kb = jax.random.split(key)
        # PyTorch Conv2d weight layout: (embed_dim, in_chans, ph, pw)
        fan_in = in_chans * patch_size[0] * patch_size[1]
        bound = 1.0 / (fan_in ** 0.5)
        self.weight = jax.random.uniform(
            kw, (embed_dim, in_chans, patch_size[0], patch_size[1]),
            dtype=jnp.float32, minval=-bound, maxval=bound)
        self.bias = jax.random.uniform(
            kb, (embed_dim,), dtype=jnp.float32, minval=-bound, maxval=bound)

        # Precompute the matmul weight once:
        #  Conv2d (E, C, ph, pw) -> (ph, pw, C, E) -> (ph*pw*C, E), matching the
        #  (kh, kw, c) patch-flatten order used in __call__ (keeps C lane-minor).
        ph, pw = patch_size
        w_km = jnp.transpose(self.weight, (2, 3, 1, 0)).reshape(ph * pw * in_chans,
                                                                embed_dim)
        # Pad N (embed_dim) up to a multiple of 128 lanes so output stores are
        # unmasked; padded columns are zero and get sliced off after the kernel.
        self.n_pad = ((embed_dim + LANE - 1) // LANE) * LANE
        w_pad = jnp.zeros((w_km.shape[0], self.n_pad), jnp.float32)
        w_pad = w_pad.at[:, :embed_dim].set(w_km)
        self.w_km = w_pad.astype(jnp.bfloat16)          # bf16 weight for the MXU
        b_pad = jnp.zeros((1, self.n_pad), jnp.float32)
        self.bias2d = b_pad.at[:, :embed_dim].set(self.bias)   # f32 bias add

    @functools.partial(jax.jit, static_argnums=0)
    def __call__(self, x):
        # x: (B, H, W, C)  -- NHWC, as in the PyTorch forward's input convention.
        B, H, W, C = x.shape
        ph, pw = self.patch_size
        Hp, Wp = H // ph, W // pw

        # Patchify with (kh, kw, c) flatten order: C stays the minor (lane) axis,
        # so this relayout is much cheaper than moving C in front of the window.
        patches = x.reshape(B, Hp, ph, Wp, pw, C)
        patches = patches.transpose(0, 1, 3, 2, 4, 5)          # (B, Hp, Wp, ph, pw, C)
        patches = patches.reshape(B * Hp * Wp, ph * pw * C)    # (M, K)
        patches = patches.astype(jnp.bfloat16)                 # halve HBM read traffic

        out = _proj_pallas(patches, self.w_km, self.bias2d,
                           block_m=self.block_m)               # (M, N_pad) f32
        out = out[:, :self.embed_dim]                          # drop zero-padded lanes
        return out.reshape(B, Hp * Wp, self.embed_dim)         # (B, num_patches, E)


# ---------------------------------------------------------------------------
# Reference (pure JAX f32 conv) for a correctness sanity check
# ---------------------------------------------------------------------------
def _reference(x, weight, bias, patch_size, embed_dim):
    B, H, W, C = x.shape
    x_nchw = jnp.transpose(x, (0, 3, 1, 2))
    y = lax.conv_general_dilated(
        x_nchw, weight, window_strides=patch_size, padding="VALID",
        dimension_numbers=("NCHW", "OIHW", "NCHW"))
    y = y + bias.reshape(1, -1, 1, 1)
    y = jnp.transpose(y, (0, 2, 3, 1))                          # (B, Hp, Wp, E)
    return y.reshape(B, -1, embed_dim)


if __name__ == "__main__":
    key = jax.random.PRNGKey(0)
    k_param, k_x = jax.random.split(key)

    # Small shapes consistent with the module: B=2, H=W=16, C=4, patch=(4,4), E=32
    B, H, W, C = 2, 16, 16, 4
    patch_size = (4, 4)
    embed_dim = 32

    module = PatchEmbedPallas(img_size=(H, W), patch_size=patch_size,
                              in_chans=C, embed_dim=embed_dim, key=k_param)

    x = jax.random.normal(k_x, (B, H, W, C), dtype=jnp.float32)

    out = module(x)
    out = jax.block_until_ready(out)

    ref = _reference(x, module.weight, module.bias, patch_size, embed_dim)
    assert out.shape == (B, module.num_patches, embed_dim), out.shape
    # Tolerance accounts for bf16 activations/weights (f32 accumulation inside).
    assert jnp.allclose(out, ref, atol=3e-2, rtol=3e-2), "mismatch vs reference conv"

    print("KERNEL_OK")
</pallas_src>

<mosaic_0001>
module attributes {stable_mosaic.version = 11 : i64} {
  func.func @_proj_kernel(%arg0: i32, %arg1: memref<32x64xbf16, #tpu.memory_space<vmem>>, %arg2: memref<64x128xbf16, #tpu.memory_space<vmem>>, %arg3: memref<1x128xf32, #tpu.memory_space<vmem>>, %arg4: memref<32x128xf32, #tpu.memory_space<vmem>>) attributes {dimension_semantics = [#tpu.dimension_semantics<parallel>], iteration_bounds = array<i64: 1>, scalar_prefetch = 0 : i64, scratch_operands = 0 : i64, tpu.core_type = #tpu.core_type<tc>, window_params = [{transform_indices = @transform_0, window_bounds = array<i64: 32, 64>}, {pipeline_mode = #tpu.pipeline_mode<synchronous>, transform_indices = @transform_1, window_bounds = array<i64: 64, 128>}, {pipeline_mode = #tpu.pipeline_mode<synchronous>, transform_indices = @transform_2, window_bounds = array<i64: 1, 128>}, {transform_indices = @transform_3, window_bounds = array<i64: 32, 128>}]} {
    %c0 = arith.constant 0 : index
    %c0_0 = arith.constant 0 : index
    %0 = vector.load %arg1[%c0, %c0_0] : memref<32x64xbf16, #tpu.memory_space<vmem>>, vector<32x64xbf16>
    %c0_1 = arith.constant 0 : index
    %c0_2 = arith.constant 0 : index
    %1 = vector.load %arg2[%c0_1, %c0_2] : memref<64x128xbf16, #tpu.memory_space<vmem>>, vector<64x128xbf16>
    %cst = arith.constant dense<0.000000e+00> : vector<32x128xf32>
    %2 = tpu.matmul %0, %1, %cst {dimension_numbers = #tpu.dot_dimension_numbers<[1], [0], [0], [1], [0, 0, 1, 1], [], []>} : vector<32x64xbf16>, vector<64x128xbf16>, vector<32x128xf32> -> vector<32x128xf32>
    %c0_3 = arith.constant 0 : index
    %c0_4 = arith.constant 0 : index
    %3 = vector.load %arg3[%c0_3, %c0_4] : memref<1x128xf32, #tpu.memory_space<vmem>>, vector<1x128xf32>
    %4 = vector.broadcast %3 : vector<1x128xf32> to vector<32x128xf32>
    %5 = arith.addf %2, %4 : vector<32x128xf32>
    %c0_5 = arith.constant 0 : index
    %c0_6 = arith.constant 0 : index
    %6 = vector.load %arg4[%c0_5, %c0_6] : memref<32x128xf32, #tpu.memory_space<vmem>>, vector<32x128xf32>
    tpu.vector_store %arg4[%c0_5, %c0_6], %5 {strides = array<i32>} : memref<32x128xf32, #tpu.memory_space<vmem>>, vector<32x128xf32>,
    return
  }
  func.func @transform_0(%arg0: i32) -> (i32, i32) {
    %c0_i32 = arith.constant 0 : i32
    %c0_i32_0 = arith.constant 0 : i32
    return %arg0, %c0_i32 : i32, i32
  }
  func.func @transform_1(%arg0: i32) -> (i32, i32) {
    %c0_i32 = arith.constant 0 : i32
    %c0_i32_0 = arith.constant 0 : i32
    %c0_i32_1 = arith.constant 0 : i32
    return %c0_i32, %c0_i32_0 : i32, i32
  }
  func.func @transform_2(%arg0: i32) -> (i32, i32) {
    %c0_i32 = arith.constant 0 : i32
    %c0_i32_0 = arith.constant 0 : i32
    %c0_i32_1 = arith.constant 0 : i32
    return %c0_i32, %c0_i32_0 : i32, i32
  }
  func.func @transform_3(%arg0: i32) -> (i32, i32) {
    %c0_i32 = arith.constant 0 : i32
    %c0_i32_0 = arith.constant 0 : i32
    return %arg0, %c0_i32 : i32, i32
  }
}

</mosaic_0001>

<llo_original>
// kernel: a_call__.1
$region0: #{a_call__.1}
  #allocation0 [shape = 'u32[]', space=smem, size = 0x4, offset = 0x4, fixed_abs, tag = 'smem constant byte address 0x4 - core index']
  #allocation1 [shape = 'u32[144,128]{1,0:T(1,128)}', space=vmem, size = 0x12000, scoped, tag = 'internal scratch']
  %s0 = inlined_call_operand.vmem [shape: bf16[32,64], index: 0, kind: input, shape index: {}]
  %s1 = inlined_call_operand.vmem [shape: bf16[64,128], index: 1, kind: input, shape index: {}]
  %s2 = inlined_call_operand.vmem [shape: f32[1,128], index: 2, kind: input, shape index: {}]
  %s3 = inlined_call_operand.hbm [shape: f32[32,128], index: 3, kind: output, shape index: {}]
  %s4 = sld [smem:[#allocation0]]
  $region22: #{a_call__.1} parent=0
    _
  %s6 = ssub.s32 1, %s4
  %s7 = scalar_select 0, %s6, %s4
  $region1: #{a_call__.1} parent=0
    #allocation2 [shape = 'u8[16384]{0}', space=vmem, size = 0x4000, scoped, tag = 'output window, operand 0, single buffered']
    #allocation3 [shape = 's32[1]{0}', space=sflag, size = 0x4, scoped, tag = 'scoped memory for a_call__.1']
    %8 = vsyncpa [#allocation3], 0
    // Predicated region
    $region2: #{a_call__.1} parent=1 // pred_check
      _
    $region3: #{a_call__.1} parent=1 // pred_check_branch
      %10 = sbr.rel (0) target = $region5
    $region4: #{a_call__.1} parent=1 // pred_region
      _
    $region5: #{a_call__.1} parent=1 // pred_fallthru
      _
    // Predicated region
    $region6: #{a_call__.1} parent=1 // pred_check
      _
    $region7: #{a_call__.1} parent=1 // pred_check_branch
      %12 = sbr.rel (0) target = $region9
    $region8: #{a_call__.1} parent=1 // pred_region
      _
    $region9: #{a_call__.1} parent=1 // pred_fallthru
      _
    // Predicated region
    $region10: #{a_call__.1} parent=1 // pred_check
      _
    $region11: #{a_call__.1} parent=1 // pred_check_branch
      %14 = sbr.rel (0) target = $region13
    $region12: #{a_call__.1} parent=1 // pred_region
      _
    $region13: #{a_call__.1} parent=1 // pred_fallthru
      _
    %v16 = vld [vmem:[%s0] sm:$0xf]
    %v17 = vld [vmem:[%s0 + $0x4] sm:$0xf]
    %v18 = vld [vmem:[%s0 + $0x8] sm:$0xf]
    %v19 = vld [vmem:[%s0 + $0xc] sm:$0xf]
    %v20 = vld [vmem:[%s1] sm:$0xf]
    %v21 = vld [vmem:[%s1 + $0x4] sm:$0xf]
    %v22 = vld [vmem:[%s1 + $0x8] sm:$0xf]
    %v23 = vld [vmem:[%s1 + $0xc] sm:$0xf]
    %v24 = vld [vmem:[%s1 + $0x10] sm:$0xf]
    %v25 = vld [vmem:[%s1 + $0x14] sm:$0xf]
    %v26 = vld [vmem:[%s1 + $0x18] sm:$0xf]
    %v27 = vld [vmem:[%s1 + $0x1c] sm:$0xf]
    %v28 = vld [vmem:[%s2] sm:$0x1]
    %v30 = vlaneseq
    %v31 = vshrl.u32 %v30, 7
    %v32 = vsub.s32 0, %v31
    %v33 = vrot.slane %v28, %v32
    %v39 = vunpack.c.l.b16 %v16
    %v40 = vunpack.c.l.b16 %v17
    %v41 = vunpack.c.l.b16 %v18
    %v42 = vunpack.c.l.b16 %v19
    %v43 = vpack.c.b16 %v40, %v39
    %v44 = vpack.c.b16 %v42, %v41
    %v53 = vunpack.c.l.b16 %v20
    %v54 = vunpack.c.l.b16 %v21
    %v55 = vunpack.c.l.b16 %v22
    %v56 = vunpack.c.l.b16 %v23
    %v57 = vunpack.c.l.b16 %v24
    %v58 = vunpack.c.l.b16 %v25
    %v59 = vunpack.c.l.b16 %v26
    %v60 = vunpack.c.l.b16 %v27
    %v61 = vpack.c.b16 %v54, %v53
    %v62 = vpack.c.b16 %v56, %v55
    %v63 = vpack.c.b16 %v58, %v57
    %v64 = vpack.c.b16 %v60, %v59
    %vm69 = vcmask 523264
    %v71 = vsel %vm69, %v43, 0
    %v74 = vsel %vm69, %v44, 0
    %76 = vmatprep.subr.bf16.mxu0 0
    %77 = vmatpush1.bf16.msra.mxu0 %v61
    %78 = vmatprep.subr.bf16.mxu0 0
    %79 = vmatpush1.bf16.msra.mxu0 %v62
    %80 = vmatprep.subr.bf16.mxu0 0
    %81 = vmatpush1.bf16.msra.mxu0 %v63
    %82 = vmatprep.subr.bf16.mxu0 0
    %83 = vmatpush1.bf16.msra.mxu0 %v64
    %84 = vmatprep.subr.bf16.mxu0 0
    %85 = vmatpush1.bf16.msra.mxu0 0
    %86 = vmatprep.subr.bf16.mxu0 0
    %87 = vmatpush1.bf16.msra.mxu0 0
    %88 = vmatprep.subr.bf16.mxu0 0
    %89 = vmatpush1.bf16.msra.mxu0 0
    %90 = vmatprep.subr.bf16.mxu0 0
    %91 = vmatpush1.bf16.msra.mxu0 0
    %92 = vmatprep.subr.bf16.mxu0 0
    %93 = vmatpush1.bf16.msra.mxu0 0
    %94 = vmatprep.subr.bf16.mxu0 0
    %95 = vmatpush1.bf16.msra.mxu0 0
    %96 = vmatprep.subr.bf16.mxu0 0
    %97 = vmatpush1.bf16.msra.mxu0 0
    %98 = vmatprep.subr.bf16.mxu0 0
    %99 = vmatpush1.bf16.msra.mxu0 0
    %100 = vmatprep.subr.bf16.mxu0 0
    %101 = vmatpush1.bf16.msra.mxu0 0
    %102 = vmatprep.subr.bf16.mxu0 0
    %103 = vmatpush1.bf16.msra.mxu0 0
    %104 = vmatprep.subr.bf16.mxu0 0
    %105 = vmatpush1.bf16.msra.mxu0 0
    %106 = vmatprep.subr.bf16.mxu0 0
    %107 = vmatpush1.bf16.msra.mxu0 0
    %108 = vmatprep.mubr.bf16.mxu0 0
    %109 = vmatmul.mubr.bf16.gmra.mrb[0].mxu0 %v71
    %v110 = vpop.f32.mrb[0].mxu0
    %v111 = vadd.f32 %v33, %v110
    %v112 = vpop.f32.mrb[0].mxu0
    %v113 = vpop.f32.mrb[0].mxu0
    %v114 = vadd.f32 %v33, %v113
    %v115 = vpop.f32.mrb[0].mxu0
    %116 = vmatprep.mubr.bf16.mxu0 0
    %117 = vmatmul.mubr.bf16.gmra.mrb[0].mxu0 %v74
    %v118 = vpop.f32.mrb[0].mxu0
    %v119 = vadd.f32 %v33, %v118
    %v120 = vpop.f32.mrb[0].mxu0
    %v121 = vpop.f32.mrb[0].mxu0
    %v122 = vadd.f32 %v33, %v121
    %v123 = vpop.f32.mrb[0].mxu0
    %124 = vdwg.mxu0
    %125 = vst [vmem:[#allocation2] sm:$0xff] %v111
    %126 = vst [vmem:[#allocation2 + $0x8] sm:$0xff] %v114
    %127 = vst [vmem:[#allocation2 + $0x10] sm:$0xff] %v119
    %128 = vst [vmem:[#allocation2 + $0x18] sm:$0xff] %v122
    // Predicated region
    $region14: #{a_call__.1} parent=1 // pred_check
      _
    $region15: #{a_call__.1} parent=1 // pred_check_branch
      %130 = sbr.rel (0) target = $region17
    $region16: #{a_call__.1} parent=1 // pred_region
      %s132 = ssub.s32 512, 512
      %133 = vsyncadd [#allocation3], %s132
      %s134 = sshll.u32 [#allocation2], 4
      %s135 = int_to_ptr.vmem [resolvable:$true] %s134
      %140 = dma.vmem_to_hbm [thread:$0]  %s135, 512, %s3, [#allocation3], 128, 128, 8
    $region17: #{a_call__.1} parent=1 // pred_fallthru
      _
    // Predicated region
    $region18: #{a_call__.1} parent=1 // pred_check
      _
    $region19: #{a_call__.1} parent=1 // pred_check_branch
      %142 = sbr.rel (0) target = $region21
    $region20: #{a_call__.1} parent=1 // pred_region
      %143 = dma.done [#allocation3], 512
    $region21: #{a_call__.1} parent=1 // pred_fallthru
      _
    %144 = vsyncpa [#allocation3], 1

</llo_original>
